<compile_context>
chip_gen: v7x
topology: tpu7x:2x2x1
jax: 0.10.0
libtpu: 0.0.40
codegen_flags: <defaults>
</compile_context>

<pallas_src>
import jax
import jax.numpy as jnp
from jax.experimental import pallas as pl
from jax.experimental.pallas import tpu as pltpu


_LANE = 128
_SUBLANE = 8
_NEG_BIG = -1e30  # effectively -inf for padded output columns in log_softmax


def _round_up(x, m):
    return (x + m - 1) // m * m


def _choose_batch_tile(bsz, batch_tile):
    """Sublane-aligned batch tile.

    Guarantees >= 2 grid steps when bsz > 8 (so v7x's two TensorCores both get
    work), caps the tile at `batch_tile`, and keeps ragged-batch waste to at
    most 7 rows per grid step.
    """
    if bsz <= _SUBLANE:
        return _SUBLANE
    n_steps = max(2, pl.cdiv(bsz, batch_tile))
    return min(batch_tile, _round_up(pl.cdiv(bsz, n_steps), _SUBLANE))


def _linear_logsoftmax_kernel(x_ref, w_ref, b_ref, o_ref):
    # x_ref: (TB, d_in) f32 | w_ref: (d_in, N_pad) bf16 | b_ref: (1, N_pad) f32
    # Cast x to the MXU compute dtype in-kernel (VPU work hidden under DMA/MXU)
    # instead of materializing a padded bf16 copy of x in the wrapper.
    x = x_ref[...]
    if x.dtype != w_ref.dtype:
        x = x.astype(w_ref.dtype)
    logits = jnp.dot(x, w_ref[...],
                     preferred_element_type=jnp.float32) + b_ref[...]
    # Numerically-stable log_softmax along the last (lane) axis, all in f32.
    m = jnp.max(logits, axis=-1, keepdims=True)
    shifted = logits - m
    lse = jnp.log(jnp.sum(jnp.exp(shifted), axis=-1, keepdims=True))
    o_ref[...] = (shifted - lse).astype(o_ref.dtype)


def make_func(weight, bias, *, batch_tile=512, compute_dtype=jnp.bfloat16):
    """Build `func(x) = log_softmax(x @ weight + bias)` backed by a Pallas kernel."""
    d_in, d_out = weight.shape
    n_pad = _round_up(d_out, _LANE)
    batch_tile = _round_up(batch_tile, _SUBLANE)

    # Parameters are prepared once: W cast to the MXU compute dtype and padded
    # to lane-dense n_pad columns (no K padding needed -- the kernel uses the
    # full-K block).  Padded columns get a -1e30 bias so exp underflows to 0
    # and they drop out of the softmax denominator; the wrapper slices them off.
    w_p = (jnp.zeros((d_in, n_pad), jnp.float32)
           .at[:, :d_out].set(weight.astype(jnp.float32))
           .astype(compute_dtype))
    b_p = (jnp.full((1, n_pad), _NEG_BIG, jnp.float32)
           .at[0, :d_out].set(bias.astype(jnp.float32)))

    def func(x):
        bsz = x.shape[0]
        tb = _choose_batch_tile(bsz, batch_tile)
        grid = (pl.cdiv(bsz, tb),)

        cost = pl.CostEstimate(
            flops=2 * grid[0] * tb * d_in * n_pad,
            transcendentals=grid[0] * tb * n_pad,
            bytes_accessed=(x.size * x.dtype.itemsize
                            + w_p.size * w_p.dtype.itemsize
                            + b_p.size * 4
                            + bsz * n_pad * 4),
        )

        out_pad = pl.pallas_call(
            _linear_logsoftmax_kernel,
            out_shape=jax.ShapeDtypeStruct((bsz, n_pad), jnp.float32),
            grid_spec=pltpu.PrefetchScalarGridSpec(
                num_scalar_prefetch=0,
                grid=grid,
                in_specs=[
                    # x streamed straight from HBM: batch-tiled, full-K block
                    # (block dim == array dim, so no 128-multiple needed).
                    pl.BlockSpec((tb, d_in), lambda i: (i, 0)),
                    pl.BlockSpec((d_in, n_pad), lambda i: (0, 0)),  # resident W
                    pl.BlockSpec((1, n_pad), lambda i: (0, 0)),     # resident b
                ],
                # Lane-dense (128-wide) output tiles; the tail block of a
                # ragged batch is a masked partial store.
                out_specs=pl.BlockSpec((tb, n_pad), lambda i: (i, 0)),
            ),
            compiler_params=pltpu.CompilerParams(
                dimension_semantics=("parallel",),
            ),
            cost_estimate=cost,
        )(x, w_p, b_p)

        # Drop the padded output columns (tiny bsz x 10 copy).  Kept outside
        # the kernel so in-kernel stores stay lane-dense (no vst.msk).
        return out_pad[:, :d_out]

    return func


class Net:
    """Faithful JAX analogue of the PyTorch Net module: forward(x) = func(x)."""

    def __init__(self, func):
        self.func = func

    def __call__(self, x):
        return self.func(x)


if __name__ == "__main__":
    # MNIST-logistic shapes from the tutorial: 784 -> 10.
    d_in, d_out = 784, 10

    key = jax.random.PRNGKey(0)
    kx, kw, kb = jax.random.split(key, 3)
    weight = jax.random.normal(kw, (d_in, d_out), dtype=jnp.float32) / jnp.sqrt(d_in)
    bias = jax.random.normal(kb, (d_out,), dtype=jnp.float32) * 0.01

    net = Net(make_func(weight, bias))
    wb = weight.astype(jnp.bfloat16).astype(jnp.float32)

    # batch=256: even 2-step parallel grid (both v7x TCs busy).
    # batch=200: ragged batch -> 2 x 104-row tiles with a masked tail block.
    # batch=8:   tiny batch -> single 8-row tile, no padding.
    for batch in (256, 200, 8):
        x = jax.random.normal(kx, (batch, d_in), dtype=jnp.float32)
        out = jax.block_until_ready(net(x))
        assert out.shape == (batch, d_out)

        # Tight check vs a reference using the same bf16-rounded operands
        # (matches the kernel's bf16 dot inputs + f32 accumulation).
        xb = x.astype(jnp.bfloat16).astype(jnp.float32)
        ref_bf = jax.nn.log_softmax(xb @ wb + bias, axis=-1)
        assert jnp.allclose(out, ref_bf, atol=1e-3, rtol=1e-3), batch

        # Looser sanity check vs the full-f32 reference (bf16 rounding only).
        ref_f32 = jax.nn.log_softmax(x @ weight + bias, axis=-1)
        assert jnp.allclose(out, ref_f32, atol=5e-2, rtol=5e-2), batch

    print("KERNEL_OK")
</pallas_src>

<mosaic_0001>
module attributes {stable_mosaic.version = 11 : i64} {
  func.func @_linear_logsoftmax_kernel(%arg0: i32, %arg1: memref<128x784xf32, #tpu.memory_space<vmem>>, %arg2: memref<784x128xbf16, #tpu.memory_space<vmem>>, %arg3: memref<1x128xf32, #tpu.memory_space<vmem>>, %arg4: memref<128x128xf32, #tpu.memory_space<vmem>>) attributes {dimension_semantics = [#tpu.dimension_semantics<parallel>], iteration_bounds = array<i64: 2>, scalar_prefetch = 0 : i64, scratch_operands = 0 : i64, tpu.core_type = #tpu.core_type<tc>, window_params = [{transform_indices = @transform_0, window_bounds = array<i64: 128, 784>}, {pipeline_mode = #tpu.pipeline_mode<synchronous>, transform_indices = @transform_1, window_bounds = array<i64: 784, 128>}, {pipeline_mode = #tpu.pipeline_mode<synchronous>, transform_indices = @transform_2, window_bounds = array<i64: 1, 128>}, {transform_indices = @transform_3, window_bounds = array<i64: 128, 128>}]} {
    %c0 = arith.constant 0 : index
    %c0_0 = arith.constant 0 : index
    %0 = vector.load %arg1[%c0, %c0_0] : memref<128x784xf32, #tpu.memory_space<vmem>>, vector<128x784xf32>
    %1 = arith.truncf %0 : vector<128x784xf32> to vector<128x784xbf16>
    %c0_1 = arith.constant 0 : index
    %c0_2 = arith.constant 0 : index
    %2 = vector.load %arg2[%c0_1, %c0_2] : memref<784x128xbf16, #tpu.memory_space<vmem>>, vector<784x128xbf16>
    %cst = arith.constant dense<0.000000e+00> : vector<128x128xf32>
    %3 = tpu.matmul %1, %2, %cst {dimension_numbers = #tpu.dot_dimension_numbers<[1], [0], [0], [1], [0, 0, 1, 1], [], []>} : vector<128x784xbf16>, vector<784x128xbf16>, vector<128x128xf32> -> vector<128x128xf32>
    %c0_3 = arith.constant 0 : index
    %c0_4 = arith.constant 0 : index
    %4 = vector.load %arg3[%c0_3, %c0_4] : memref<1x128xf32, #tpu.memory_space<vmem>>, vector<1x128xf32>
    %5 = vector.broadcast %4 : vector<1x128xf32> to vector<128x128xf32>
    %6 = arith.addf %3, %5 : vector<128x128xf32>
    %cst_5 = arith.constant dense<0xFF800000> : vector<128xf32>
    %7 = vector.multi_reduction <maximumf>, %6, %cst_5 [1] : vector<128x128xf32> to vector<128xf32>
    %8 = vector.shape_cast %7 : vector<128xf32> to vector<128x1xf32>
    %9 = vector.broadcast %8 : vector<128x1xf32> to vector<128x128xf32>
    %10 = arith.subf %6, %9 : vector<128x128xf32>
    %11 = math.exp %10 : vector<128x128xf32>
    %cst_6 = arith.constant dense<0.000000e+00> : vector<128xf32>
    %12 = vector.multi_reduction <add>, %11, %cst_6 [1] : vector<128x128xf32> to vector<128xf32>
    %13 = vector.shape_cast %12 : vector<128xf32> to vector<128x1xf32>
    %14 = math.log %13 : vector<128x1xf32>
    %15 = vector.broadcast %14 : vector<128x1xf32> to vector<128x128xf32>
    %16 = arith.subf %10, %15 : vector<128x128xf32>
    %c0_7 = arith.constant 0 : index
    %c0_8 = arith.constant 0 : index
    %17 = vector.load %arg4[%c0_7, %c0_8] : memref<128x128xf32, #tpu.memory_space<vmem>>, vector<128x128xf32>
    tpu.vector_store %arg4[%c0_7, %c0_8], %16 {strides = array<i32>} : memref<128x128xf32, #tpu.memory_space<vmem>>, vector<128x128xf32>,
    return
  }
  func.func @transform_0(%arg0: i32) -> (i32, i32) {
    %c0_i32 = arith.constant 0 : i32
    %c0_i32_0 = arith.constant 0 : i32
    return %arg0, %c0_i32 : i32, i32
  }
  func.func @transform_1(%arg0: i32) -> (i32, i32) {
    %c0_i32 = arith.constant 0 : i32
    %c0_i32_0 = arith.constant 0 : i32
    %c0_i32_1 = arith.constant 0 : i32
    return %c0_i32, %c0_i32_0 : i32, i32
  }
  func.func @transform_2(%arg0: i32) -> (i32, i32) {
    %c0_i32 = arith.constant 0 : i32
    %c0_i32_0 = arith.constant 0 : i32
    %c0_i32_1 = arith.constant 0 : i32
    return %c0_i32, %c0_i32_0 : i32, i32
  }
  func.func @transform_3(%arg0: i32) -> (i32, i32) {
    %c0_i32 = arith.constant 0 : i32
    %c0_i32_0 = arith.constant 0 : i32
    return %arg0, %c0_i32 : i32, i32
  }
}

</mosaic_0001>

<llo_original>
// kernel: tpu_custom_call.1
$region0: #{tpu_custom_call.1}
  #allocation0 [shape = 'u32[]', space=smem, size = 0x4, offset = 0x4, fixed_abs, tag = 'smem constant byte address 0x4 - core index']
  #allocation1 [shape = 'u32[144,128]{1,0:T(1,128)}', space=vmem, size = 0x12000, scoped, tag = 'internal scratch']
  %s0 = inlined_call_operand.vmem [shape: f32[256,784], index: 0, kind: input, shape index: {}]
  %s1 = inlined_call_operand.vmem [shape: bf16[784,128], index: 1, kind: input, shape index: {}]
  %s2 = inlined_call_operand.vmem [shape: f32[1,128], index: 2, kind: input, shape index: {}]
  %s3 = inlined_call_operand.hbm [shape: f32[256,128], index: 3, kind: output, shape index: {}]
  %s4 = sld [smem:[#allocation0]]
  $region45: #{tpu_custom_call.1} parent=0
    _
  %s6 = ssub.s32 1, %s4
  %s7 = scalar_select 0, %s6, %s4
  $region1: #{tpu_custom_call.1} parent=0
    #allocation2 [shape = 'u8[131072]{0}', space=vmem, size = 0x20000, scoped, tag = 'output window, operand 0']
    #allocation3 [shape = 's32[2]{0}', space=sflag, size = 0x8, scoped, tag = 'scoped memory for tpu_custom_call.1']
    %8 = vsyncpa [#allocation3], 0
    %s9 = scalar_lea.sflag [#allocation3], 1
    %10 = vsyncpa %s9, 0
    loop: start=0, step=1, limit=4
    $region2: #{tpu_custom_call.1} parent=1 // loop_pre_header
      _
    $region3: #{tpu_custom_call.1} parent=1 // loop_header
      %s12 = sphi 0, %s16
      %p13 = scmp.ge.s32.totalorder %s12, 4
      %s22 = sphi 0, %s24
      %s25 = sphi 0, %s22
      %s26 = sphi 0, %s25
      %s42 = sphi 0, %s26
      %s46 = sphi 0, %s46
      %s48 = sphi 0, %s46
      %s49 = sphi 0, %s48
      %s63 = sphi 0, %s49
      %s67 = sphi 0, %s67
      %s69 = sphi 0, %s67
      %s70 = sphi 0, %s69
      %s84 = sphi 0, %s70
      %s90 = sphi 0, %s92
      %s93 = sphi 0, %s90
      %s94 = sphi 0, %s93
      %s110 = sphi 0, %s94
    $region4: #{tpu_custom_call.1} parent=1 // loop_header_branch
      %15 = sbr.rel (%p13) target = $region8
    $region5: #{tpu_custom_call.1} parent=1 // loop_body
      %s17 = ssub.s32 %s12, 1
      %s18 = ssub.s32 %s12, 2
      %s19 = sadd.s32 %s12, 1
      %s20 = ssub.s32 %s12, %s19
      %p21 = scmp.eq.s32.totalorder %s20, 0
      %s23 = sadd.s32 %s22, 1
      %s24 = scalar_select %p21, %s22, %s23
      %p27 = pneg %p21
      %p28 = scmp.eq.s32.totalorder %s12, 1
      %p29 = por %p27, %p28
      %p30 = scmp.ne.s32.totalorder %s22, %s25
      %p31 = scmp.eq.s32.totalorder %s12, 0
      %p32 = por %p30, %p31
      %p33 = scmp.ne.s32.totalorder %s22, %s25
      %p34 = scmp.eq.s32.totalorder %s17, 1
      %p35 = por %p33, %p34
      %p36 = scmp.ne.s32.totalorder %s25, %s26
      %p37 = scmp.eq.s32.totalorder %s17, 0
      %p38 = por %p36, %p37
      %p39 = scmp.ne.s32.totalorder %s25, %s26
      %p40 = scmp.eq.s32.totalorder %s18, 1
      %p41 = por %p39, %p40
      %p43 = scmp.ne.s32.totalorder %s26, %s42
      %p44 = scmp.eq.s32.totalorder %s18, 0
      %p45 = por %p43, %p44
      %s47 = sadd.s32 %s46, 1
      %p50 = scmp.eq.s32.totalorder %s12, 1
      %p51 = scmp.ne.s32.totalorder %s46, %s48
      %p52 = scmp.eq.s32.totalorder %s12, 0
      %p53 = por %p51, %p52
      %p54 = scmp.ne.s32.totalorder %s46, %s48
      %p55 = scmp.eq.s32.totalorder %s17, 1
      %p56 = por %p54, %p55
      %p57 = scmp.ne.s32.totalorder %s48, %s49
      %p58 = scmp.eq.s32.totalorder %s17, 0
      %p59 = por %p57, %p58
      %p60 = scmp.ne.s32.totalorder %s48, %s49
      %p61 = scmp.eq.s32.totalorder %s18, 1
      %p62 = por %p60, %p61
      %p64 = scmp.ne.s32.totalorder %s49, %s63
      %p65 = scmp.eq.s32.totalorder %s18, 0
      %p66 = por %p64, %p65
      %s68 = sadd.s32 %s67, 1
      %p71 = scmp.eq.s32.totalorder %s12, 1
      %p72 = scmp.ne.s32.totalorder %s67, %s69
      %p73 = scmp.eq.s32.totalorder %s12, 0
      %p74 = por %p72, %p73
      %p75 = scmp.ne.s32.totalorder %s67, %s69
      %p76 = scmp.eq.s32.totalorder %s17, 1
      %p77 = por %p75, %p76
      %p78 = scmp.ne.s32.totalorder %s69, %s70
      %p79 = scmp.eq.s32.totalorder %s17, 0
      %p80 = por %p78, %p79
      %p81 = scmp.ne.s32.totalorder %s69, %s70
      %p82 = scmp.eq.s32.totalorder %s18, 1
      %p83 = por %p81, %p82
      %p85 = scmp.ne.s32.totalorder %s70, %s84
      %p86 = scmp.eq.s32.totalorder %s18, 0
      %p87 = por %p85, %p86
      %s88 = ssub.s32 %s12, %s19
      %p89 = scmp.eq.s32.totalorder %s88, 0
      %s91 = sadd.s32 %s90, 1
      %s92 = scalar_select %p89, %s90, %s91
      %p95 = pneg %p89
      %p96 = scmp.eq.s32.totalorder %s12, 1
      %p97 = por %p95, %p96
      %p98 = scmp.ne.s32.totalorder %s90, %s93
      %p99 = scmp.eq.s32.totalorder %s12, 0
      %p100 = por %p98, %p99
      %p101 = scmp.ne.s32.totalorder %s90, %s93
      %p102 = scmp.eq.s32.totalorder %s17, 1
      %p103 = por %p101, %p102
      %p104 = scmp.ne.s32.totalorder %s93, %s94
      %p105 = scmp.eq.s32.totalorder %s17, 0
      %p106 = por %p104, %p105
      %p107 = scmp.ne.s32.totalorder %s93, %s94
      %p108 = scmp.eq.s32.totalorder %s18, 1
      %p109 = por %p107, %p108
      %p111 = scmp.ne.s32.totalorder %s94, %s110
      %p112 = scmp.eq.s32.totalorder %s18, 0
      %p113 = por %p111, %p112
      %p114 = scmp.le.s32.totalorder 1, %s12
      %p115 = scmp.lt.s32.totalorder %s12, 3
      %p116 = pnand %p114, %p115
      %p117 = pneg %p116
      // Predicated region
      $region9: #{tpu_custom_call.1} parent=5 // pred_check
        _
      $region10: #{tpu_custom_call.1} parent=5 // pred_check_branch
        %119 = sbr.rel (%p116) target = $region12
      $region11: #{tpu_custom_call.1} parent=5 // pred_region
        %s120 = ssub.s32 %s12, 1
        // Predicated region
        $region13: #{tpu_custom_call.1} parent=11 // pred_check
          %p121 = pneg %p59
        $region14: #{tpu_custom_call.1} parent=11 // pred_check_branch
          %123 = sbr.rel (%p121) target = $region16
        $region15: #{tpu_custom_call.1} parent=11 // pred_region
          _
        $region16: #{tpu_custom_call.1} parent=11 // pred_fallthru
          _
        // Predicated region
        $region17: #{tpu_custom_call.1} parent=11 // pred_check
          %p124 = pneg %p80
        $region18: #{tpu_custom_call.1} parent=11 // pred_check_branch
          %126 = sbr.rel (%p124) target = $region20
        $region19: #{tpu_custom_call.1} parent=11 // pred_region
          _
        $region20: #{tpu_custom_call.1} parent=11 // pred_fallthru
          _
      $region12: #{tpu_custom_call.1} parent=5 // pred_fallthru
        _
      %p127 = scmp.lt.s32.totalorder %s12, 2
      // Predicated region
      $region21: #{tpu_custom_call.1} parent=5 // pred_check
        %p128 = pneg %p127
      $region22: #{tpu_custom_call.1} parent=5 // pred_check_branch
        %130 = sbr.rel (%p128) target = $region24
      $region23: #{tpu_custom_call.1} parent=5 // pred_region
        // Predicated region
        $region25: #{tpu_custom_call.1} parent=23 // pred_check
          %p131 = pneg %p32
        $region26: #{tpu_custom_call.1} parent=23 // pred_check_branch
          %133 = sbr.rel (%p131) target = $region28
        $region27: #{tpu_custom_call.1} parent=23 // pred_region
          %s134 = smul.u32 16, %s12
          %p135 = scmp.lt.s32.totalorder %s134, 31
          %s136 = scalar_select %p135, %s134, 31
          %s137 = smul.addr %s136, 7
          %s138 = smul.addr %s137, 8
          %s139 = scalar_lea.vmem %s0, %s138
          %s140 = smul.u32 16, %s12
        $region28: #{tpu_custom_call.1} parent=23 // pred_fallthru
          _
      $region24: #{tpu_custom_call.1} parent=5 // pred_fallthru
        _
      %p141 = scmp.le.s32.totalorder 1, %s12
      %p142 = scmp.lt.s32.totalorder %s12, 3
      %p143 = pnand %p141, %p142
      %p144 = pneg %p143
      // Predicated region
      $region29: #{tpu_custom_call.1} parent=5 // pred_check
        _
      $region30: #{tpu_custom_call.1} parent=5 // pred_check_branch
        %146 = sbr.rel (%p143) target = $region32
      $region31: #{tpu_custom_call.1} parent=5 // pred_region
        %s147 = ssub.s32 %s12, 1
        %s148 = smul.u32 16, %s17
        %p149 = scmp.lt.s32.totalorder %s148, 31
        %s150 = scalar_select %p149, %s148, 31
        %s151 = smul.addr %s150, 7
        %s152 = smul.addr %s151, 8
        %s153 = scalar_lea.vmem %s0, %s152
        %p154 = pneg %p38
        %p155 = pneg %p35
        %p156 = pneg %p59
        %p157 = pneg %p56
        %p158 = pneg %p80
        %p159 = pneg %p77
        %p160 = pneg %p106
        %p161 = pneg %p103
        %s162 = sand.u32 %s93, 1
        %s163 = scalar_lea.sflag [#allocation3], %s162
        %s164 = sand.u32 %s93, 1
        %s165 = smul.addr %s164, 128
        %s166 = scalar_lea.vmem [#allocation2], %s165
        %s167 = smul.u32 16, %s17
        %p168 = scmp.lt.s32.totalorder %s167, 31
        %s169 = scalar_select %p168, %s167, 31
        %s170 = smul.addr %s169, 7
        %s171 = smul.addr %s170, 8
        %s172 = scalar_lea.vmem %s0, %s171
        %s173 = smul.u32 16, %s17
        %s174 = smul.u32 16, %s17
        %v176 = vld [vmem:[%s172] sm:$0xff]
        %v177 = vld [vmem:[%s172 + $0x8] sm:$0xff]
        %v178 = vld [vmem:[%s172 + $0x10] sm:$0xff]
        %v179 = vld [vmem:[%s172 + $0x18] sm:$0xff]
        %v180 = vld [vmem:[%s172 + $0x20] sm:$0xff]
        %v181 = vld [vmem:[%s172 + $0x28] sm:$0xff]
        %v182 = vld [vmem:[%s172 + $0x30] sm:$0xff]
        %v183 = vld [vmem:[%s172 + $0x38] sm:$0xff]
        %v184 = vld [vmem:[%s172 + $0x40] sm:$0xff]
        %v185 = vld [vmem:[%s172 + $0x48] sm:$0xff]
        %v186 = vld [vmem:[%s172 + $0x50] sm:$0xff]
        %v187 = vld [vmem:[%s172 + $0x58] sm:$0xff]
        %v188 = vld [vmem:[%s172 + $0x60] sm:$0xff]
        %v189 = vld [vmem:[%s172 + $0x68] sm:$0xff]
        %v190 = vld [vmem:[%s172 + $0x70] sm:$0xff]
        %v191 = vld [vmem:[%s172 + $0x78] sm:$0xff]
        %v192 = vld [vmem:[%s172 + $0x80] sm:$0xff]
        %v193 = vld [vmem:[%s172 + $0x88] sm:$0xff]
        %v194 = vld [vmem:[%s172 + $0x90] sm:$0xff]
        %v195 = vld [vmem:[%s172 + $0x98] sm:$0xff]
        %v196 = vld [vmem:[%s172 + $0xa0] sm:$0xff]
        %v197 = vld [vmem:[%s172 + $0xa8] sm:$0xff]
        %v198 = vld [vmem:[%s172 + $0xb0] sm:$0xff]
        %v199 = vld [vmem:[%s172 + $0xb8] sm:$0xff]
        %v200 = vld [vmem:[%s172 + $0xc0] sm:$0xff]
        %v201 = vld [vmem:[%s172 + $0xc8] sm:$0xff]
        %v202 = vld [vmem:[%s172 + $0xd0] sm:$0xff]
        %v203 = vld [vmem:[%s172 + $0xd8] sm:$0xff]
        %v204 = vld [vmem:[%s172 + $0xe0] sm:$0xff]
        %v205 = vld [vmem:[%s172 + $0xe8] sm:$0xff]
        %v206 = vld [vmem:[%s172 + $0xf0] sm:$0xff]
        %v207 = vld [vmem:[%s172 + $0xf8] sm:$0xff]
        %v208 = vld [vmem:[%s172 + $0x100] sm:$0xff]
        %v209 = vld [vmem:[%s172 + $0x108] sm:$0xff]
        %v210 = vld [vmem:[%s172 + $0x110] sm:$0xff]
        %v211 = vld [vmem:[%s172 + $0x118] sm:$0xff]
        %v212 = vld [vmem:[%s172 + $0x120] sm:$0xff]
        %v213 = vld [vmem:[%s172 + $0x128] sm:$0xff]
        %v214 = vld [vmem:[%s172 + $0x130] sm:$0xff]
        %v215 = vld [vmem:[%s172 + $0x138] sm:$0xff]
        %v216 = vld [vmem:[%s172 + $0x140] sm:$0xff]
        %v217 = vld [vmem:[%s172 + $0x148] sm:$0xff]
        %v218 = vld [vmem:[%s172 + $0x150] sm:$0xff]
        %v219 = vld [vmem:[%s172 + $0x158] sm:$0xff]
        %v220 = vld [vmem:[%s172 + $0x160] sm:$0xff]
        %v221 = vld [vmem:[%s172 + $0x168] sm:$0xff]
        %v222 = vld [vmem:[%s172 + $0x170] sm:$0xff]
        %v223 = vld [vmem:[%s172 + $0x178] sm:$0xff]
        %v224 = vld [vmem:[%s172 + $0x180] sm:$0xff]
        %v225 = vld [vmem:[%s172 + $0x188] sm:$0xff]
        %v226 = vld [vmem:[%s172 + $0x190] sm:$0xff]
        %v227 = vld [vmem:[%s172 + $0x198] sm:$0xff]
        %v228 = vld [vmem:[%s172 + $0x1a0] sm:$0xff]
        %v229 = vld [vmem:[%s172 + $0x1a8] sm:$0xff]
        %v230 = vld [vmem:[%s172 + $0x1b0] sm:$0xff]
        %v231 = vld [vmem:[%s172 + $0x1b8] sm:$0xff]
        %v232 = vld [vmem:[%s172 + $0x1c0] sm:$0xff]
        %v233 = vld [vmem:[%s172 + $0x1c8] sm:$0xff]
        %v234 = vld [vmem:[%s172 + $0x1d0] sm:$0xff]
        %v235 = vld [vmem:[%s172 + $0x1d8] sm:$0xff]
        %v236 = vld [vmem:[%s172 + $0x1e0] sm:$0xff]
        %v237 = vld [vmem:[%s172 + $0x1e8] sm:$0xff]
        %v238 = vld [vmem:[%s172 + $0x1f0] sm:$0xff]
        %v239 = vld [vmem:[%s172 + $0x1f8] sm:$0xff]
        %v240 = vld [vmem:[%s172 + $0x200] sm:$0xff]
        %v241 = vld [vmem:[%s172 + $0x208] sm:$0xff]
        %v242 = vld [vmem:[%s172 + $0x210] sm:$0xff]
        %v243 = vld [vmem:[%s172 + $0x218] sm:$0xff]
        %v244 = vld [vmem:[%s172 + $0x220] sm:$0xff]
        %v245 = vld [vmem:[%s172 + $0x228] sm:$0xff]
        %v246 = vld [vmem:[%s172 + $0x230] sm:$0xff]
        %v247 = vld [vmem:[%s172 + $0x238] sm:$0xff]
        %v248 = vld [vmem:[%s172 + $0x240] sm:$0xff]
        %v249 = vld [vmem:[%s172 + $0x248] sm:$0xff]
        %v250 = vld [vmem:[%s172 + $0x250] sm:$0xff]
        %v251 = vld [vmem:[%s172 + $0x258] sm:$0xff]
        %v252 = vld [vmem:[%s172 + $0x260] sm:$0xff]
        %v253 = vld [vmem:[%s172 + $0x268] sm:$0xff]
        %v254 = vld [vmem:[%s172 + $0x270] sm:$0xff]
        %v255 = vld [vmem:[%s172 + $0x278] sm:$0xff]
        %v256 = vld [vmem:[%s172 + $0x280] sm:$0xff]
        %v257 = vld [vmem:[%s172 + $0x288] sm:$0xff]
        %v258 = vld [vmem:[%s172 + $0x290] sm:$0xff]
        %v259 = vld [vmem:[%s172 + $0x298] sm:$0xff]
        %v260 = vld [vmem:[%s172 + $0x2a0] sm:$0xff]
        %v261 = vld [vmem:[%s172 + $0x2a8] sm:$0xff]
        %v262 = vld [vmem:[%s172 + $0x2b0] sm:$0xff]
        %v263 = vld [vmem:[%s172 + $0x2b8] sm:$0xff]
        %v264 = vld [vmem:[%s172 + $0x2c0] sm:$0xff]
        %v265 = vld [vmem:[%s172 + $0x2c8] sm:$0xff]
        %v266 = vld [vmem:[%s172 + $0x2d0] sm:$0xff]
        %v267 = vld [vmem:[%s172 + $0x2d8] sm:$0xff]
        %v268 = vld [vmem:[%s172 + $0x2e0] sm:$0xff]
        %v269 = vld [vmem:[%s172 + $0x2e8] sm:$0xff]
        %v270 = vld [vmem:[%s172 + $0x2f0] sm:$0xff]
        %v271 = vld [vmem:[%s172 + $0x2f8] sm:$0xff]
        %v272 = vld [vmem:[%s172 + $0x300] sm:$0xff]
        %v273 = vld [vmem:[%s172 + $0x308] sm:$0xff]
        %v274 = vld [vmem:[%s172 + $0x310] sm:$0xff]
        %v275 = vld [vmem:[%s172 + $0x318] sm:$0xff]
        %v276 = vld [vmem:[%s172 + $0x320] sm:$0xff]
        %v277 = vld [vmem:[%s172 + $0x328] sm:$0xff]
        %v278 = vld [vmem:[%s172 + $0x330] sm:$0xff]
        %v279 = vld [vmem:[%s172 + $0x338] sm:$0xff]
        %v280 = vld [vmem:[%s172 + $0x340] sm:$0xff]
        %v281 = vld [vmem:[%s172 + $0x348] sm:$0xff]
        %v282 = vld [vmem:[%s172 + $0x350] sm:$0xff]
        %v283 = vld [vmem:[%s172 + $0x358] sm:$0xff]
        %v284 = vld [vmem:[%s172 + $0x360] sm:$0xff]
        %v285 = vld [vmem:[%s172 + $0x368] sm:$0xff]
        %v286 = vld [vmem:[%s172 + $0x370] sm:$0xff]
        %v287 = vld [vmem:[%s172 + $0x378] sm:$0xff]
        %v288 = vpack.c.bf16 %v183, %v176
        %v289 = vpack.c.bf16 %v184, %v177
        %v290 = vpack.c.bf16 %v185, %v178
        %v291 = vpack.c.bf16 %v186, %v179
        %v292 = vpack.c.bf16 %v187, %v180
        %v293 = vpack.c.bf16 %v188, %v181
        %v294 = vpack.c.bf16 %v189, %v182
        %v295 = vpack.c.bf16 %v197, %v190
        %v296 = vpack.c.bf16 %v198, %v191
        %v297 = vpack.c.bf16 %v199, %v192
        %v298 = vpack.c.bf16 %v200, %v193
        %v299 = vpack.c.bf16 %v201, %v194
        %v300 = vpack.c.bf16 %v202, %v195
        %v301 = vpack.c.bf16 %v203, %v196
        %v302 = vpack.c.bf16 %v211, %v204
        %v303 = vpack.c.bf16 %v212, %v205
        %v304 = vpack.c.bf16 %v213, %v206
        %v305 = vpack.c.bf16 %v214, %v207
        %v306 = vpack.c.bf16 %v215, %v208
        %v307 = vpack.c.bf16 %v216, %v209
        %v308 = vpack.c.bf16 %v217, %v210
        %v309 = vpack.c.bf16 %v225, %v218
        %v310 = vpack.c.bf16 %v226, %v219
        %v311 = vpack.c.bf16 %v227, %v220
        %v312 = vpack.c.bf16 %v228, %v221
        %v313 = vpack.c.bf16 %v229, %v222
        %v314 = vpack.c.bf16 %v230, %v223
        %v315 = vpack.c.bf16 %v231, %v224
        %v316 = vpack.c.bf16 %v239, %v232
        %v317 = vpack.c.bf16 %v240, %v233
        %v318 = vpack.c.bf16 %v241, %v234
        %v319 = vpack.c.bf16 %v242, %v235
        %v320 = vpack.c.bf16 %v243, %v236
        %v321 = vpack.c.bf16 %v244, %v237
        %v322 = vpack.c.bf16 %v245, %v238
        %v323 = vpack.c.bf16 %v253, %v246
        %v324 = vpack.c.bf16 %v254, %v247
        %v325 = vpack.c.bf16 %v255, %v248
        %v326 = vpack.c.bf16 %v256, %v249
        %v327 = vpack.c.bf16 %v257, %v250
        %v328 = vpack.c.bf16 %v258, %v251
        %v329 = vpack.c.bf16 %v259, %v252
        %v330 = vpack.c.bf16 %v267, %v260
        %v331 = vpack.c.bf16 %v268, %v261
        %v332 = vpack.c.bf16 %v269, %v262
        %v333 = vpack.c.bf16 %v270, %v263
        %v334 = vpack.c.bf16 %v271, %v264
        %v335 = vpack.c.bf16 %v272, %v265
        %v336 = vpack.c.bf16 %v273, %v266
        %v337 = vpack.c.bf16 %v281, %v274
        %v338 = vpack.c.bf16 %v282, %v275
        %v339 = vpack.c.bf16 %v283, %v276
        %v340 = vpack.c.bf16 %v284, %v277
        %v341 = vpack.c.bf16 %v285, %v278
        %v342 = vpack.c.bf16 %v286, %v279
        %v343 = vpack.c.bf16 %v287, %v280
        %v344 = vld [vmem:[%s1] sm:$0xf]
        %v345 = vld [vmem:[%s1 + $0x4] sm:$0xf]
        %v346 = vld [vmem:[%s1 + $0x8] sm:$0xf]
        %v347 = vld [vmem:[%s1 + $0xc] sm:$0xf]
        %v348 = vld [vmem:[%s1 + $0x10] sm:$0xf]
        %v349 = vld [vmem:[%s1 + $0x14] sm:$0xf]
        %v350 = vld [vmem:[%s1 + $0x18] sm:$0xf]
        %v351 = vld [vmem:[%s1 + $0x1c] sm:$0xf]
        %v352 = vld [vmem:[%s1 + $0x20] sm:$0xf]
        %v353 = vld [vmem:[%s1 + $0x24] sm:$0xf]
        %v354 = vld [vmem:[%s1 + $0x28] sm:$0xf]
        %v355 = vld [vmem:[%s1 + $0x2c] sm:$0xf]
        %v356 = vld [vmem:[%s1 + $0x30] sm:$0xf]
        %v357 = vld [vmem:[%s1 + $0x34] sm:$0xf]
        %v358 = vld [vmem:[%s1 + $0x38] sm:$0xf]
        %v359 = vld [vmem:[%s1 + $0x3c] sm:$0xf]
        %v360 = vld [vmem:[%s1 + $0x40] sm:$0xf]
        %v361 = vld [vmem:[%s1 + $0x44] sm:$0xf]
        %v362 = vld [vmem:[%s1 + $0x48] sm:$0xf]
        %v363 = vld [vmem:[%s1 + $0x4c] sm:$0xf]
        %v364 = vld [vmem:[%s1 + $0x50] sm:$0xf]
        %v365 = vld [vmem:[%s1 + $0x54] sm:$0xf]
        %v366 = vld [vmem:[%s1 + $0x58] sm:$0xf]
        %v367 = vld [vmem:[%s1 + $0x5c] sm:$0xf]
        %v368 = vld [vmem:[%s1 + $0x60] sm:$0xf]
        %v369 = vld [vmem:[%s1 + $0x64] sm:$0xf]
        %v370 = vld [vmem:[%s1 + $0x68] sm:$0xf]
        %v371 = vld [vmem:[%s1 + $0x6c] sm:$0xf]
        %v372 = vld [vmem:[%s1 + $0x70] sm:$0xf]
        %v373 = vld [vmem:[%s1 + $0x74] sm:$0xf]
        %v374 = vld [vmem:[%s1 + $0x78] sm:$0xf]
        %v375 = vld [vmem:[%s1 + $0x7c] sm:$0xf]
        %v376 = vld [vmem:[%s1 + $0x80] sm:$0xf]
        %v377 = vld [vmem:[%s1 + $0x84] sm:$0xf]
        %v378 = vld [vmem:[%s1 + $0x88] sm:$0xf]
        %v379 = vld [vmem:[%s1 + $0x8c] sm:$0xf]
        %v380 = vld [vmem:[%s1 + $0x90] sm:$0xf]
        %v381 = vld [vmem:[%s1 + $0x94] sm:$0xf]
        %v382 = vld [vmem:[%s1 + $0x98] sm:$0xf]
        %v383 = vld [vmem:[%s1 + $0x9c] sm:$0xf]
        %v384 = vld [vmem:[%s1 + $0xa0] sm:$0xf]
        %v385 = vld [vmem:[%s1 + $0xa4] sm:$0xf]
        %v386 = vld [vmem:[%s1 + $0xa8] sm:$0xf]
        %v387 = vld [vmem:[%s1 + $0xac] sm:$0xf]
        %v388 = vld [vmem:[%s1 + $0xb0] sm:$0xf]
        %v389 = vld [vmem:[%s1 + $0xb4] sm:$0xf]
        %v390 = vld [vmem:[%s1 + $0xb8] sm:$0xf]
        %v391 = vld [vmem:[%s1 + $0xbc] sm:$0xf]
        %v392 = vld [vmem:[%s1 + $0xc0] sm:$0xf]
        %v393 = vld [vmem:[%s1 + $0xc4] sm:$0xf]
        %v394 = vld [vmem:[%s1 + $0xc8] sm:$0xf]
        %v395 = vld [vmem:[%s1 + $0xcc] sm:$0xf]
        %v396 = vld [vmem:[%s1 + $0xd0] sm:$0xf]
        %v397 = vld [vmem:[%s1 + $0xd4] sm:$0xf]
        %v398 = vld [vmem:[%s1 + $0xd8] sm:$0xf]
        %v399 = vld [vmem:[%s1 + $0xdc] sm:$0xf]
        %v400 = vld [vmem:[%s1 + $0xe0] sm:$0xf]
        %v401 = vld [vmem:[%s1 + $0xe4] sm:$0xf]
        %v402 = vld [vmem:[%s1 + $0xe8] sm:$0xf]
        %v403 = vld [vmem:[%s1 + $0xec] sm:$0xf]
        %v404 = vld [vmem:[%s1 + $0xf0] sm:$0xf]
        %v405 = vld [vmem:[%s1 + $0xf4] sm:$0xf]
        %v406 = vld [vmem:[%s1 + $0xf8] sm:$0xf]
        %v407 = vld [vmem:[%s1 + $0xfc] sm:$0xf]
        %v408 = vld [vmem:[%s1 + $0x100] sm:$0xf]
        %v409 = vld [vmem:[%s1 + $0x104] sm:$0xf]
        %v410 = vld [vmem:[%s1 + $0x108] sm:$0xf]
        %v411 = vld [vmem:[%s1 + $0x10c] sm:$0xf]
        %v412 = vld [vmem:[%s1 + $0x110] sm:$0xf]
        %v413 = vld [vmem:[%s1 + $0x114] sm:$0xf]
        %v414 = vld [vmem:[%s1 + $0x118] sm:$0xf]
        %v415 = vld [vmem:[%s1 + $0x11c] sm:$0xf]
        %v416 = vld [vmem:[%s1 + $0x120] sm:$0xf]
        %v417 = vld [vmem:[%s1 + $0x124] sm:$0xf]
        %v418 = vld [vmem:[%s1 + $0x128] sm:$0xf]
        %v419 = vld [vmem:[%s1 + $0x12c] sm:$0xf]
        %v420 = vld [vmem:[%s1 + $0x130] sm:$0xf]
        %v421 = vld [vmem:[%s1 + $0x134] sm:$0xf]
        %v422 = vld [vmem:[%s1 + $0x138] sm:$0xf]
        %v423 = vld [vmem:[%s1 + $0x13c] sm:$0xf]
        %v424 = vld [vmem:[%s1 + $0x140] sm:$0xf]
        %v425 = vld [vmem:[%s1 + $0x144] sm:$0xf]
        %v426 = vld [vmem:[%s1 + $0x148] sm:$0xf]
        %v427 = vld [vmem:[%s1 + $0x14c] sm:$0xf]
        %v428 = vld [vmem:[%s1 + $0x150] sm:$0xf]
        %v429 = vld [vmem:[%s1 + $0x154] sm:$0xf]
        %v430 = vld [vmem:[%s1 + $0x158] sm:$0xf]
        %v431 = vld [vmem:[%s1 + $0x15c] sm:$0xf]
        %v432 = vld [vmem:[%s1 + $0x160] sm:$0xf]
        %v433 = vld [vmem:[%s1 + $0x164] sm:$0xf]
        %v434 = vld [vmem:[%s1 + $0x168] sm:$0xf]
        %v435 = vld [vmem:[%s1 + $0x16c] sm:$0xf]
        %v436 = vld [vmem:[%s1 + $0x170] sm:$0xf]
        %v437 = vld [vmem:[%s1 + $0x174] sm:$0xf]
        %v438 = vld [vmem:[%s1 + $0x178] sm:$0xf]
        %v439 = vld [vmem:[%s1 + $0x17c] sm:$0xf]
        %v440 = vld [vmem:[%s1 + $0x180] sm:$0xf]
        %v441 = vld [vmem:[%s1 + $0x184] sm:$0xf]
        %v442 = vld [vmem:[%s2] sm:$0x1]
        %v444 = vlaneseq
        %v445 = vshrl.u32 %v444, 7
        %v446 = vsub.s32 0, %v445
        %v447 = vrot.slane %v442, %v446
        %v547 = vunpack.c.l.b16 %v344
        %v548 = vunpack.c.l.b16 %v345
        %v549 = vunpack.c.l.b16 %v346
        %v550 = vunpack.c.l.b16 %v347
        %v551 = vunpack.c.l.b16 %v348
        %v552 = vunpack.c.l.b16 %v349
        %v553 = vunpack.c.l.b16 %v350
        %v554 = vunpack.c.l.b16 %v351
        %v555 = vunpack.c.l.b16 %v352
        %v556 = vunpack.c.l.b16 %v353
        %v557 = vunpack.c.l.b16 %v354
        %v558 = vunpack.c.l.b16 %v355
        %v559 = vunpack.c.l.b16 %v356
        %v560 = vunpack.c.l.b16 %v357
        %v561 = vunpack.c.l.b16 %v358
        %v562 = vunpack.c.l.b16 %v359
        %v563 = vunpack.c.l.b16 %v360
        %v564 = vunpack.c.l.b16 %v361
        %v565 = vunpack.c.l.b16 %v362
        %v566 = vunpack.c.l.b16 %v363
        %v567 = vunpack.c.l.b16 %v364
        %v568 = vunpack.c.l.b16 %v365
        %v569 = vunpack.c.l.b16 %v366
        %v570 = vunpack.c.l.b16 %v367
        %v571 = vunpack.c.l.b16 %v368
        %v572 = vunpack.c.l.b16 %v369
        %v573 = vunpack.c.l.b16 %v370
        %v574 = vunpack.c.l.b16 %v371
        %v575 = vunpack.c.l.b16 %v372
        %v576 = vunpack.c.l.b16 %v373
        %v577 = vunpack.c.l.b16 %v374
        %v578 = vunpack.c.l.b16 %v375
        %v579 = vunpack.c.l.b16 %v376
        %v580 = vunpack.c.l.b16 %v377
        %v581 = vunpack.c.l.b16 %v378
        %v582 = vunpack.c.l.b16 %v379
        %v583 = vunpack.c.l.b16 %v380
        %v584 = vunpack.c.l.b16 %v381
        %v585 = vunpack.c.l.b16 %v382
        %v586 = vunpack.c.l.b16 %v383
        %v587 = vunpack.c.l.b16 %v384
        %v588 = vunpack.c.l.b16 %v385
        %v589 = vunpack.c.l.b16 %v386
        %v590 = vunpack.c.l.b16 %v387
        %v591 = vunpack.c.l.b16 %v388
        %v592 = vunpack.c.l.b16 %v389
        %v593 = vunpack.c.l.b16 %v390
        %v594 = vunpack.c.l.b16 %v391
        %v595 = vunpack.c.l.b16 %v392
        %v596 = vunpack.c.l.b16 %v393
        %v597 = vunpack.c.l.b16 %v394
        %v598 = vunpack.c.l.b16 %v395
        %v599 = vunpack.c.l.b16 %v396
        %v600 = vunpack.c.l.b16 %v397
        %v601 = vunpack.c.l.b16 %v398
        %v602 = vunpack.c.l.b16 %v399
        %v603 = vunpack.c.l.b16 %v400
        %v604 = vunpack.c.l.b16 %v401
        %v605 = vunpack.c.l.b16 %v402
        %v606 = vunpack.c.l.b16 %v403
        %v607 = vunpack.c.l.b16 %v404
        %v608 = vunpack.c.l.b16 %v405
        %v609 = vunpack.c.l.b16 %v406
        %v610 = vunpack.c.l.b16 %v407
        %v611 = vunpack.c.l.b16 %v408
        %v612 = vunpack.c.l.b16 %v409
        %v613 = vunpack.c.l.b16 %v410
        %v614 = vunpack.c.l.b16 %v411
        %v615 = vunpack.c.l.b16 %v412
        %v616 = vunpack.c.l.b16 %v413
        %v617 = vunpack.c.l.b16 %v414
        %v618 = vunpack.c.l.b16 %v415
        %v619 = vunpack.c.l.b16 %v416
        %v620 = vunpack.c.l.b16 %v417
        %v621 = vunpack.c.l.b16 %v418
        %v622 = vunpack.c.l.b16 %v419
        %v623 = vunpack.c.l.b16 %v420
        %v624 = vunpack.c.l.b16 %v421
        %v625 = vunpack.c.l.b16 %v422
        %v626 = vunpack.c.l.b16 %v423
        %v627 = vunpack.c.l.b16 %v424
        %v628 = vunpack.c.l.b16 %v425
        %v629 = vunpack.c.l.b16 %v426
        %v630 = vunpack.c.l.b16 %v427
        %v631 = vunpack.c.l.b16 %v428
        %v632 = vunpack.c.l.b16 %v429
        %v633 = vunpack.c.l.b16 %v430
        %v634 = vunpack.c.l.b16 %v431
        %v635 = vunpack.c.l.b16 %v432
        %v636 = vunpack.c.l.b16 %v433
        %v637 = vunpack.c.l.b16 %v434
        %v638 = vunpack.c.l.b16 %v435
        %v639 = vunpack.c.l.b16 %v436
        %v640 = vunpack.c.l.b16 %v437
        %v641 = vunpack.c.l.b16 %v438
        %v642 = vunpack.c.l.b16 %v439
        %v643 = vunpack.c.l.b16 %v440
        %v644 = vunpack.c.l.b16 %v441
        %v645 = vpack.c.b16 %v548, %v547
        %v646 = vpack.c.b16 %v550, %v549
        %v647 = vpack.c.b16 %v552, %v551
        %v648 = vpack.c.b16 %v554, %v553
        %v649 = vpack.c.b16 %v556, %v555
        %v650 = vpack.c.b16 %v558, %v557
        %v651 = vpack.c.b16 %v560, %v559
        %v652 = vpack.c.b16 %v562, %v561
        %v653 = vpack.c.b16 %v564, %v563
        %v654 = vpack.c.b16 %v566, %v565
        %v655 = vpack.c.b16 %v568, %v567
        %v656 = vpack.c.b16 %v570, %v569
        %v657 = vpack.c.b16 %v572, %v571
        %v658 = vpack.c.b16 %v574, %v573
        %v659 = vpack.c.b16 %v576, %v575
        %v660 = vpack.c.b16 %v578, %v577
        %v661 = vpack.c.b16 %v580, %v579
        %v662 = vpack.c.b16 %v582, %v581
        %v663 = vpack.c.b16 %v584, %v583
        %v664 = vpack.c.b16 %v586, %v585
        %v665 = vpack.c.b16 %v588, %v587
        %v666 = vpack.c.b16 %v590, %v589
        %v667 = vpack.c.b16 %v592, %v591
        %v668 = vpack.c.b16 %v594, %v593
        %v669 = vpack.c.b16 %v596, %v595
        %v670 = vpack.c.b16 %v598, %v597
        %v671 = vpack.c.b16 %v600, %v599
        %v672 = vpack.c.b16 %v602, %v601
        %v673 = vpack.c.b16 %v604, %v603
        %v674 = vpack.c.b16 %v606, %v605
        %v675 = vpack.c.b16 %v608, %v607
        %v676 = vpack.c.b16 %v610, %v609
        %v677 = vpack.c.b16 %v612, %v611
        %v678 = vpack.c.b16 %v614, %v613
        %v679 = vpack.c.b16 %v616, %v615
        %v680 = vpack.c.b16 %v618, %v617
        %v681 = vpack.c.b16 %v620, %v619
        %v682 = vpack.c.b16 %v622, %v621
        %v683 = vpack.c.b16 %v624, %v623
        %v684 = vpack.c.b16 %v626, %v625
        %v685 = vpack.c.b16 %v628, %v627
        %v686 = vpack.c.b16 %v630, %v629
        %v687 = vpack.c.b16 %v632, %v631
        %v688 = vpack.c.b16 %v634, %v633
        %v689 = vpack.c.b16 %v636, %v635
        %v690 = vpack.c.b16 %v638, %v637
        %v691 = vpack.c.b16 %v640, %v639
        %v692 = vpack.c.b16 %v642, %v641
        %v693 = vpack.c.b16 %v644, %v643
        %vm743 = vcmask 130048
        %v745 = vsel %vm743, %v294, 0
        %v748 = vsel %vm743, %v301, 0
        %v751 = vsel %vm743, %v308, 0
        %v754 = vsel %vm743, %v315, 0
        %v757 = vsel %vm743, %v322, 0
        %v760 = vsel %vm743, %v329, 0
        %v763 = vsel %vm743, %v336, 0
        %v766 = vsel %vm743, %v343, 0
        %768 = vmatprep.subr.bf16.mxu0 0
        %769 = vmatpush1.bf16.msra.mxu0 %v645
        %770 = vmatprep.subr.bf16.mxu0 0
        %771 = vmatpush1.bf16.msra.mxu0 %v646
        %772 = vmatprep.subr.bf16.mxu0 0
        %773 = vmatpush1.bf16.msra.mxu0 %v647
        %774 = vmatprep.subr.bf16.mxu0 0
        %775 = vmatpush1.bf16.msra.mxu0 %v648
        %776 = vmatprep.subr.bf16.mxu0 0
        %777 = vmatpush1.bf16.msra.mxu0 %v649
        %778 = vmatprep.subr.bf16.mxu0 0
        %779 = vmatpush1.bf16.msra.mxu0 %v650
        %780 = vmatprep.subr.bf16.mxu0 0
        %781 = vmatpush1.bf16.msra.mxu0 %v651
        %782 = vmatprep.subr.bf16.mxu0 0
        %783 = vmatpush1.bf16.msra.mxu0 %v652
        %784 = vmatprep.subr.bf16.mxu0 0
        %785 = vmatpush1.bf16.msra.mxu0 %v653
        %786 = vmatprep.subr.bf16.mxu0 0
        %787 = vmatpush1.bf16.msra.mxu0 %v654
        %788 = vmatprep.subr.bf16.mxu0 0
        %789 = vmatpush1.bf16.msra.mxu0 %v655
        %790 = vmatprep.subr.bf16.mxu0 0
        %791 = vmatpush1.bf16.msra.mxu0 %v656
        %792 = vmatprep.subr.bf16.mxu0 0
        %793 = vmatpush1.bf16.msra.mxu0 %v657
        %794 = vmatprep.subr.bf16.mxu0 0
        %795 = vmatpush1.bf16.msra.mxu0 %v658
        %796 = vmatprep.subr.bf16.mxu0 0
        %797 = vmatpush1.bf16.msra.mxu0 %v659
        %798 = vmatprep.subr.bf16.mxu0 0
        %799 = vmatpush1.bf16.msra.mxu0 %v660
        %800 = vmatprep.mubr.bf16.mxu0 %v289
        %801 = vmatmul.mubr.bf16.gmra.mrb[0].mxu0 %v288
        %v802 = vpop.f32.mrb[0].mxu0
        %v803 = vadd.f32 %v447, %v802
        %v804 = vpop.f32.mrb[0].mxu0
        %v805 = vpop.f32.mrb[0].mxu0
        %v806 = vadd.f32 %v447, %v805
        %v807 = vpop.f32.mrb[0].mxu0
        %808 = vmatprep.mubr.bf16.mxu0 %v296
        %809 = vmatmul.mubr.bf16.gmra.mrb[0].mxu0 %v295
        %v810 = vpop.f32.mrb[0].mxu0
        %v811 = vadd.f32 %v447, %v810
        %v812 = vpop.f32.mrb[0].mxu0
        %v813 = vpop.f32.mrb[0].mxu0
        %v814 = vadd.f32 %v447, %v813
        %v815 = vpop.f32.mrb[0].mxu0
        %816 = vmatprep.mubr.bf16.mxu0 %v303
        %817 = vmatmul.mubr.bf16.gmra.mrb[0].mxu0 %v302
        %v818 = vpop.f32.mrb[0].mxu0
        %v819 = vadd.f32 %v447, %v818
        %v820 = vpop.f32.mrb[0].mxu0
        %v821 = vpop.f32.mrb[0].mxu0
        %v822 = vadd.f32 %v447, %v821
        %v823 = vpop.f32.mrb[0].mxu0
        %824 = vmatprep.mubr.bf16.mxu0 %v310
        %825 = vmatmul.mubr.bf16.gmra.mrb[0].mxu0 %v309
        %v826 = vpop.f32.mrb[0].mxu0
        %v827 = vadd.f32 %v447, %v826
        %v828 = vpop.f32.mrb[0].mxu0
        %v829 = vpop.f32.mrb[0].mxu0
        %v830 = vadd.f32 %v447, %v829
        %v831 = vpop.f32.mrb[0].mxu0
        %832 = vmatprep.mubr.bf16.mxu0 %v317
        %833 = vmatmul.mubr.bf16.gmra.mrb[0].mxu0 %v316
        %v834 = vpop.f32.mrb[0].mxu0
        %v835 = vadd.f32 %v447, %v834
        %v836 = vpop.f32.mrb[0].mxu0
        %v837 = vpop.f32.mrb[0].mxu0
        %v838 = vadd.f32 %v447, %v837
        %v839 = vpop.f32.mrb[0].mxu0
        %840 = vmatprep.mubr.bf16.mxu0 %v324
        %841 = vmatmul.mubr.bf16.gmra.mrb[0].mxu0 %v323
        %v842 = vpop.f32.mrb[0].mxu0
        %v843 = vadd.f32 %v447, %v842
        %v844 = vpop.f32.mrb[0].mxu0
        %v845 = vpop.f32.mrb[0].mxu0
        %v846 = vadd.f32 %v447, %v845
        %v847 = vpop.f32.mrb[0].mxu0
        %848 = vmatprep.mubr.bf16.mxu0 %v331
        %849 = vmatmul.mubr.bf16.gmra.mrb[0].mxu0 %v330
        %v850 = vpop.f32.mrb[0].mxu0
        %v851 = vadd.f32 %v447, %v850
        %v852 = vpop.f32.mrb[0].mxu0
        %v853 = vpop.f32.mrb[0].mxu0
        %v854 = vadd.f32 %v447, %v853
        %v855 = vpop.f32.mrb[0].mxu0
        %856 = vmatprep.mubr.bf16.mxu0 %v338
        %857 = vmatmul.mubr.bf16.gmra.mrb[0].mxu0 %v337
        %v858 = vpop.f32.mrb[0].mxu0
        %v859 = vadd.f32 %v447, %v858
        %v860 = vpop.f32.mrb[0].mxu0
        %v861 = vpop.f32.mrb[0].mxu0
        %v862 = vadd.f32 %v447, %v861
        %v863 = vpop.f32.mrb[0].mxu0
        %864 = vdwg.mxu0
        %865 = vmatprep.subr.bf16.mxu0 0
        %866 = vmatpush1.bf16.msra.mxu0 %v661
        %867 = vmatprep.subr.bf16.mxu0 0
        %868 = vmatpush1.bf16.msra.mxu0 %v662
        %869 = vmatprep.subr.bf16.mxu0 0
        %870 = vmatpush1.bf16.msra.mxu0 %v663
        %871 = vmatprep.subr.bf16.mxu0 0
        %872 = vmatpush1.bf16.msra.mxu0 %v664
        %873 = vmatprep.subr.bf16.mxu0 0
        %874 = vmatpush1.bf16.msra.mxu0 %v665
        %875 = vmatprep.subr.bf16.mxu0 0
        %876 = vmatpush1.bf16.msra.mxu0 %v666
        %877 = vmatprep.subr.bf16.mxu0 0
        %878 = vmatpush1.bf16.msra.mxu0 %v667
        %879 = vmatprep.subr.bf16.mxu0 0
        %880 = vmatpush1.bf16.msra.mxu0 %v668
        %881 = vmatprep.subr.bf16.mxu0 0
        %882 = vmatpush1.bf16.msra.mxu0 %v669
        %883 = vmatprep.subr.bf16.mxu0 0
        %884 = vmatpush1.bf16.msra.mxu0 %v670
        %885 = vmatprep.subr.bf16.mxu0 0
        %886 = vmatpush1.bf16.msra.mxu0 %v671
        %887 = vmatprep.subr.bf16.mxu0 0
        %888 = vmatpush1.bf16.msra.mxu0 %v672
        %889 = vmatprep.subr.bf16.mxu0 0
        %890 = vmatpush1.bf16.msra.mxu0 %v673
        %891 = vmatprep.subr.bf16.mxu0 0
        %892 = vmatpush1.bf16.msra.mxu0 %v674
        %893 = vmatprep.subr.bf16.mxu0 0
        %894 = vmatpush1.bf16.msra.mxu0 %v675
        %895 = vmatprep.subr.bf16.mxu0 0
        %896 = vmatpush1.bf16.msra.mxu0 %v676
        %897 = vmatprep.mubr.bf16.mxu0 %v291
        %898 = vmatmul.mubr.bf16.gmra.mrb[0].mxu0 %v290
        %v899 = vpop.f32.mrb[0].mxu0
        %v900 = vadd.f32 %v803, %v899
        %v901 = vpop.f32.mrb[0].mxu0
        %v902 = vpop.f32.mrb[0].mxu0
        %v903 = vadd.f32 %v806, %v902
        %v904 = vpop.f32.mrb[0].mxu0
        %905 = vmatprep.mubr.bf16.mxu0 %v298
        %906 = vmatmul.mubr.bf16.gmra.mrb[0].mxu0 %v297
        %v907 = vpop.f32.mrb[0].mxu0
        %v908 = vadd.f32 %v811, %v907
        %v909 = vpop.f32.mrb[0].mxu0
        %v910 = vpop.f32.mrb[0].mxu0
        %v911 = vadd.f32 %v814, %v910
        %v912 = vpop.f32.mrb[0].mxu0
        %913 = vmatprep.mubr.bf16.mxu0 %v305
        %914 = vmatmul.mubr.bf16.gmra.mrb[0].mxu0 %v304
        %v915 = vpop.f32.mrb[0].mxu0
        %v916 = vadd.f32 %v819, %v915
        %v917 = vpop.f32.mrb[0].mxu0
        %v918 = vpop.f32.mrb[0].mxu0
        %v919 = vadd.f32 %v822, %v918
        %v920 = vpop.f32.mrb[0].mxu0
        %921 = vmatprep.mubr.bf16.mxu0 %v312
        %922 = vmatmul.mubr.bf16.gmra.mrb[0].mxu0 %v311
        %v923 = vpop.f32.mrb[0].mxu0
        %v924 = vadd.f32 %v827, %v923
        %v925 = vpop.f32.mrb[0].mxu0
        %v926 = vpop.f32.mrb[0].mxu0
        %v927 = vadd.f32 %v830, %v926
        %v928 = vpop.f32.mrb[0].mxu0
        %929 = vmatprep.mubr.bf16.mxu0 %v319
        %930 = vmatmul.mubr.bf16.gmra.mrb[0].mxu0 %v318
        %v931 = vpop.f32.mrb[0].mxu0
        %v932 = vadd.f32 %v835, %v931
        %v933 = vpop.f32.mrb[0].mxu0
        %v934 = vpop.f32.mrb[0].mxu0
        %v935 = vadd.f32 %v838, %v934
        %v936 = vpop.f32.mrb[0].mxu0
        %937 = vmatprep.mubr.bf16.mxu0 %v326
        %938 = vmatmul.mubr.bf16.gmra.mrb[0].mxu0 %v325
        %v939 = vpop.f32.mrb[0].mxu0
        %v940 = vadd.f32 %v843, %v939
        %v941 = vpop.f32.mrb[0].mxu0
        %v942 = vpop.f32.mrb[0].mxu0
        %v943 = vadd.f32 %v846, %v942
        %v944 = vpop.f32.mrb[0].mxu0
        %945 = vmatprep.mubr.bf16.mxu0 %v333
        %946 = vmatmul.mubr.bf16.gmra.mrb[0].mxu0 %v332
        %v947 = vpop.f32.mrb[0].mxu0
        %v948 = vadd.f32 %v851, %v947
        %v949 = vpop.f32.mrb[0].mxu0
        %v950 = vpop.f32.mrb[0].mxu0
        %v951 = vadd.f32 %v854, %v950
        %v952 = vpop.f32.mrb[0].mxu0
        %953 = vmatprep.mubr.bf16.mxu0 %v340
        %954 = vmatmul.mubr.bf16.gmra.mrb[0].mxu0 %v339
        %v955 = vpop.f32.mrb[0].mxu0
        %v956 = vadd.f32 %v859, %v955
        %v957 = vpop.f32.mrb[0].mxu0
        %v958 = vpop.f32.mrb[0].mxu0
        %v959 = vadd.f32 %v862, %v958
        %v960 = vpop.f32.mrb[0].mxu0
        %961 = vdwg.mxu0
        %962 = vmatprep.subr.bf16.mxu0 0
        %963 = vmatpush1.bf16.msra.mxu0 %v677
        %964 = vmatprep.subr.bf16.mxu0 0
        %965 = vmatpush1.bf16.msra.mxu0 %v678
        %966 = vmatprep.subr.bf16.mxu0 0
        %967 = vmatpush1.bf16.msra.mxu0 %v679
        %968 = vmatprep.subr.bf16.mxu0 0
        %969 = vmatpush1.bf16.msra.mxu0 %v680
        %970 = vmatprep.subr.bf16.mxu0 0
        %971 = vmatpush1.bf16.msra.mxu0 %v681
        %972 = vmatprep.subr.bf16.mxu0 0
        %973 = vmatpush1.bf16.msra.mxu0 %v682
        %974 = vmatprep.subr.bf16.mxu0 0
        %975 = vmatpush1.bf16.msra.mxu0 %v683
        %976 = vmatprep.subr.bf16.mxu0 0
        %977 = vmatpush1.bf16.msra.mxu0 %v684
        %978 = vmatprep.subr.bf16.mxu0 0
        %979 = vmatpush1.bf16.msra.mxu0 %v685
        %980 = vmatprep.subr.bf16.mxu0 0
        %981 = vmatpush1.bf16.msra.mxu0 %v686
        %982 = vmatprep.subr.bf16.mxu0 0
        %983 = vmatpush1.bf16.msra.mxu0 %v687
        %984 = vmatprep.subr.bf16.mxu0 0
        %985 = vmatpush1.bf16.msra.mxu0 %v688
        %986 = vmatprep.subr.bf16.mxu0 0
        %987 = vmatpush1.bf16.msra.mxu0 %v689
        %988 = vmatprep.subr.bf16.mxu0 0
        %989 = vmatpush1.bf16.msra.mxu0 %v690
        %990 = vmatprep.subr.bf16.mxu0 0
        %991 = vmatpush1.bf16.msra.mxu0 %v691
        %992 = vmatprep.subr.bf16.mxu0 0
        %993 = vmatpush1.bf16.msra.mxu0 %v692
        %994 = vmatprep.mubr.bf16.mxu0 %v293
        %995 = vmatmul.mubr.bf16.gmra.mrb[0].mxu0 %v292
        %v996 = vpop.f32.mrb[0].mxu0
        %v997 = vadd.f32 %v900, %v996
        %v998 = vpop.f32.mrb[0].mxu0
        %v999 = vpop.f32.mrb[0].mxu0
        %v1000 = vadd.f32 %v903, %v999
        %v1001 = vpop.f32.mrb[0].mxu0
        %1002 = vmatprep.mubr.bf16.mxu0 %v300
        %1003 = vmatmul.mubr.bf16.gmra.mrb[0].mxu0 %v299
        %v1004 = vpop.f32.mrb[0].mxu0
        %v1005 = vadd.f32 %v908, %v1004
        %v1006 = vpop.f32.mrb[0].mxu0
        %v1007 = vpop.f32.mrb[0].mxu0
        %v1008 = vadd.f32 %v911, %v1007
        %v1009 = vpop.f32.mrb[0].mxu0
        %1010 = vmatprep.mubr.bf16.mxu0 %v307
        %1011 = vmatmul.mubr.bf16.gmra.mrb[0].mxu0 %v306
        %v1012 = vpop.f32.mrb[0].mxu0
        %v1013 = vadd.f32 %v916, %v1012
        %v1014 = vpop.f32.mrb[0].mxu0
        %v1015 = vpop.f32.mrb[0].mxu0
        %v1016 = vadd.f32 %v919, %v1015
        %v1017 = vpop.f32.mrb[0].mxu0
        %1018 = vmatprep.mubr.bf16.mxu0 %v314
        %1019 = vmatmul.mubr.bf16.gmra.mrb[0].mxu0 %v313
        %v1020 = vpop.f32.mrb[0].mxu0
        %v1021 = vadd.f32 %v924, %v1020
        %v1022 = vpop.f32.mrb[0].mxu0
        %v1023 = vpop.f32.mrb[0].mxu0
        %v1024 = vadd.f32 %v927, %v1023
        %v1025 = vpop.f32.mrb[0].mxu0
        %1026 = vmatprep.mubr.bf16.mxu0 %v321
        %1027 = vmatmul.mubr.bf16.gmra.mrb[0].mxu0 %v320
        %v1028 = vpop.f32.mrb[0].mxu0
        %v1029 = vadd.f32 %v932, %v1028
        %v1030 = vpop.f32.mrb[0].mxu0
        %v1031 = vpop.f32.mrb[0].mxu0
        %v1032 = vadd.f32 %v935, %v1031
        %v1033 = vpop.f32.mrb[0].mxu0
        %1034 = vmatprep.mubr.bf16.mxu0 %v328
        %1035 = vmatmul.mubr.bf16.gmra.mrb[0].mxu0 %v327
        %v1036 = vpop.f32.mrb[0].mxu0
        %v1037 = vadd.f32 %v940, %v1036
        %v1038 = vpop.f32.mrb[0].mxu0
        %v1039 = vpop.f32.mrb[0].mxu0
        %v1040 = vadd.f32 %v943, %v1039
        %v1041 = vpop.f32.mrb[0].mxu0
        %1042 = vmatprep.mubr.bf16.mxu0 %v335
        %1043 = vmatmul.mubr.bf16.gmra.mrb[0].mxu0 %v334
        %v1044 = vpop.f32.mrb[0].mxu0
        %v1045 = vadd.f32 %v948, %v1044
        %v1046 = vpop.f32.mrb[0].mxu0
        %v1047 = vpop.f32.mrb[0].mxu0
        %v1048 = vadd.f32 %v951, %v1047
        %v1049 = vpop.f32.mrb[0].mxu0
        %1050 = vmatprep.mubr.bf16.mxu0 %v342
        %1051 = vmatmul.mubr.bf16.gmra.mrb[0].mxu0 %v341
        %v1052 = vpop.f32.mrb[0].mxu0
        %v1053 = vadd.f32 %v956, %v1052
        %v1054 = vpop.f32.mrb[0].mxu0
        %v1055 = vpop.f32.mrb[0].mxu0
        %v1056 = vadd.f32 %v959, %v1055
        %v1057 = vpop.f32.mrb[0].mxu0
        %1058 = vdwg.mxu0
        %1059 = vmatprep.subr.bf16.mxu0 0
        %1060 = vmatpush1.bf16.msra.mxu0 %v693
        %1061 = vmatprep.subr.bf16.mxu0 0
        %1062 = vmatpush1.bf16.msra.mxu0 0
        %1063 = vmatprep.subr.bf16.mxu0 0
        %1064 = vmatpush1.bf16.msra.mxu0 0
        %1065 = vmatprep.subr.bf16.mxu0 0
        %1066 = vmatpush1.bf16.msra.mxu0 0
        %1067 = vmatprep.subr.bf16.mxu0 0
        %1068 = vmatpush1.bf16.msra.mxu0 0
        %1069 = vmatprep.subr.bf16.mxu0 0
        %1070 = vmatpush1.bf16.msra.mxu0 0
        %1071 = vmatprep.subr.bf16.mxu0 0
        %1072 = vmatpush1.bf16.msra.mxu0 0
        %1073 = vmatprep.subr.bf16.mxu0 0
        %1074 = vmatpush1.bf16.msra.mxu0 0
        %1075 = vmatprep.subr.bf16.mxu0 0
        %1076 = vmatpush1.bf16.msra.mxu0 0
        %1077 = vmatprep.subr.bf16.mxu0 0
        %1078 = vmatpush1.bf16.msra.mxu0 0
        %1079 = vmatprep.subr.bf16.mxu0 0
        %1080 = vmatpush1.bf16.msra.mxu0 0
        %1081 = vmatprep.subr.bf16.mxu0 0
        %1082 = vmatpush1.bf16.msra.mxu0 0
        %1083 = vmatprep.subr.bf16.mxu0 0
        %1084 = vmatpush1.bf16.msra.mxu0 0
        %1085 = vmatprep.subr.bf16.mxu0 0
        %1086 = vmatpush1.bf16.msra.mxu0 0
        %1087 = vmatprep.subr.bf16.mxu0 0
        %1088 = vmatpush1.bf16.msra.mxu0 0
        %1089 = vmatprep.subr.bf16.mxu0 0
        %1090 = vmatpush1.bf16.msra.mxu0 0
        %1091 = vmatprep.mubr.bf16.mxu0 0
        %1092 = vmatmul.mubr.bf16.gmra.mrb[0].mxu0 %v745
        %v1093 = vpop.f32.mrb[0].mxu0
        %v1094 = vadd.f32 %v997, %v1093
        %v1095 = vpop.f32.mrb[0].mxu0
        %v1096 = vpop.f32.mrb[0].mxu0
        %v1097 = vadd.f32 %v1000, %v1096
        %v1098 = vpop.f32.mrb[0].mxu0
        %1099 = vmatprep.mubr.bf16.mxu0 0
        %1100 = vmatmul.mubr.bf16.gmra.mrb[0].mxu0 %v748
        %v1101 = vpop.f32.mrb[0].mxu0
        %v1102 = vadd.f32 %v1005, %v1101
        %v1103 = vpop.f32.mrb[0].mxu0
        %v1104 = vpop.f32.mrb[0].mxu0
        %v1105 = vadd.f32 %v1008, %v1104
        %v1106 = vpop.f32.mrb[0].mxu0
        %1107 = vmatprep.mubr.bf16.mxu0 0
        %1108 = vmatmul.mubr.bf16.gmra.mrb[0].mxu0 %v751
        %v1109 = vpop.f32.mrb[0].mxu0
        %v1110 = vadd.f32 %v1013, %v1109
        %v1111 = vpop.f32.mrb[0].mxu0
        %v1112 = vpop.f32.mrb[0].mxu0
        %v1113 = vadd.f32 %v1016, %v1112
        %v1114 = vpop.f32.mrb[0].mxu0
        %1115 = vmatprep.mubr.bf16.mxu0 0
        %1116 = vmatmul.mubr.bf16.gmra.mrb[0].mxu0 %v754
        %v1117 = vpop.f32.mrb[0].mxu0
        %v1118 = vadd.f32 %v1021, %v1117
        %v1119 = vpop.f32.mrb[0].mxu0
        %v1120 = vpop.f32.mrb[0].mxu0
        %v1121 = vadd.f32 %v1024, %v1120
        %v1122 = vpop.f32.mrb[0].mxu0
        %1123 = vmatprep.mubr.bf16.mxu0 0
        %1124 = vmatmul.mubr.bf16.gmra.mrb[0].mxu0 %v757
        %v1125 = vpop.f32.mrb[0].mxu0
        %v1126 = vadd.f32 %v1029, %v1125
        %v1127 = vpop.f32.mrb[0].mxu0
        %v1128 = vpop.f32.mrb[0].mxu0
        %v1129 = vadd.f32 %v1032, %v1128
        %v1130 = vpop.f32.mrb[0].mxu0
        %1131 = vmatprep.mubr.bf16.mxu0 0
        %1132 = vmatmul.mubr.bf16.gmra.mrb[0].mxu0 %v760
        %v1133 = vpop.f32.mrb[0].mxu0
        %v1134 = vadd.f32 %v1037, %v1133
        %v1135 = vpop.f32.mrb[0].mxu0
        %v1136 = vpop.f32.mrb[0].mxu0
        %v1137 = vadd.f32 %v1040, %v1136
        %v1138 = vpop.f32.mrb[0].mxu0
        %1139 = vmatprep.mubr.bf16.mxu0 0
        %1140 = vmatmul.mubr.bf16.gmra.mrb[0].mxu0 %v763
        %v1141 = vpop.f32.mrb[0].mxu0
        %v1142 = vadd.f32 %v1045, %v1141
        %v1143 = vpop.f32.mrb[0].mxu0
        %v1144 = vpop.f32.mrb[0].mxu0
        %v1145 = vadd.f32 %v1048, %v1144
        %v1146 = vpop.f32.mrb[0].mxu0
        %1147 = vmatprep.mubr.bf16.mxu0 0
        %1148 = vmatmul.mubr.bf16.gmra.mrb[0].mxu0 %v766
        %v1149 = vpop.f32.mrb[0].mxu0
        %v1150 = vadd.f32 %v1053, %v1149
        %v1151 = vpop.f32.mrb[0].mxu0
        %v1152 = vpop.f32.mrb[0].mxu0
        %v1153 = vadd.f32 %v1056, %v1152
        %v1154 = vpop.f32.mrb[0].mxu0
        %1155 = vdwg.mxu0
        %1156 = vmax.xlane.f32.xlu0 %v1094
        %v1157 = vpop.xlane.xlu0 %1156
        %1158 = vmax.xlane.f32.xlu0 %v1097
        %v1159 = vpop.xlane.xlu0 %1158
        %1160 = vmax.xlane.f32.xlu0 %v1102
        %v1161 = vpop.xlane.xlu0 %1160
        %1162 = vmax.xlane.f32.xlu0 %v1105
        %v1163 = vpop.xlane.xlu0 %1162
        %1164 = vmax.xlane.f32.xlu0 %v1110
        %v1165 = vpop.xlane.xlu0 %1164
        %1166 = vmax.xlane.f32.xlu0 %v1113
        %v1167 = vpop.xlane.xlu0 %1166
        %1168 = vmax.xlane.f32.xlu0 %v1118
        %v1169 = vpop.xlane.xlu0 %1168
        %1170 = vmax.xlane.f32.xlu0 %v1121
        %v1171 = vpop.xlane.xlu0 %1170
        %1172 = vmax.xlane.f32.xlu0 %v1126
        %v1173 = vpop.xlane.xlu0 %1172
        %1174 = vmax.xlane.f32.xlu0 %v1129
        %v1175 = vpop.xlane.xlu0 %1174
        %1176 = vmax.xlane.f32.xlu0 %v1134
        %v1177 = vpop.xlane.xlu0 %1176
        %1178 = vmax.xlane.f32.xlu0 %v1137
        %v1179 = vpop.xlane.xlu0 %1178
        %1180 = vmax.xlane.f32.xlu0 %v1142
        %v1181 = vpop.xlane.xlu0 %1180
        %1182 = vmax.xlane.f32.xlu0 %v1145
        %v1183 = vpop.xlane.xlu0 %1182
        %1184 = vmax.xlane.f32.xlu0 %v1150
        %v1185 = vpop.xlane.xlu0 %1184
        %1186 = vmax.xlane.f32.xlu0 %v1153
        %v1187 = vpop.xlane.xlu0 %1186
        %v1188 = vsub.f32 %v1094, %v1157
        %v1189 = vsub.f32 %v1097, %v1159
        %v1190 = vsub.f32 %v1102, %v1161
        %v1191 = vsub.f32 %v1105, %v1163
        %v1192 = vsub.f32 %v1110, %v1165
        %v1193 = vsub.f32 %v1113, %v1167
        %v1194 = vsub.f32 %v1118, %v1169
        %v1195 = vsub.f32 %v1121, %v1171
        %v1196 = vsub.f32 %v1126, %v1173
        %v1197 = vsub.f32 %v1129, %v1175
        %v1198 = vsub.f32 %v1134, %v1177
        %v1199 = vsub.f32 %v1137, %v1179
        %v1200 = vsub.f32 %v1142, %v1181
        %v1201 = vsub.f32 %v1145, %v1183
        %v1202 = vsub.f32 %v1150, %v1185
        %v1203 = vsub.f32 %v1153, %v1187
        %v1204 = vmul.f32 %v1188, 1.442695
        %v1205 = vpow.pop %v1204
        %v1206 = vmul.f32 %v1189, 1.442695
        %v1207 = vpow.pop %v1206
        %v1208 = vmul.f32 %v1190, 1.442695
        %v1209 = vpow.pop %v1208
        %v1210 = vmul.f32 %v1191, 1.442695
        %v1211 = vpow.pop %v1210
        %v1212 = vmul.f32 %v1192, 1.442695
        %v1213 = vpow.pop %v1212
        %v1214 = vmul.f32 %v1193, 1.442695
        %v1215 = vpow.pop %v1214
        %v1216 = vmul.f32 %v1194, 1.442695
        %v1217 = vpow.pop %v1216
        %v1218 = vmul.f32 %v1195, 1.442695
        %v1219 = vpow.pop %v1218
        %v1220 = vmul.f32 %v1196, 1.442695
        %v1221 = vpow.pop %v1220
        %v1222 = vmul.f32 %v1197, 1.442695
        %v1223 = vpow.pop %v1222
        %v1224 = vmul.f32 %v1198, 1.442695
        %v1225 = vpow.pop %v1224
        %v1226 = vmul.f32 %v1199, 1.442695
        %v1227 = vpow.pop %v1226
        %v1228 = vmul.f32 %v1200, 1.442695
        %v1229 = vpow.pop %v1228
        %v1230 = vmul.f32 %v1201, 1.442695
        %v1231 = vpow.pop %v1230
        %v1232 = vmul.f32 %v1202, 1.442695
        %v1233 = vpow.pop %v1232
        %v1234 = vmul.f32 %v1203, 1.442695
        %v1235 = vpow.pop %v1234
        %1236 = vadd.xlane.f32.xlu0 %v1205
        %v1237 = vpop.xlane.xlu0 %1236
        %1238 = vadd.xlane.f32.xlu0 %v1207
        %v1239 = vpop.xlane.xlu0 %1238
        %1240 = vadd.xlane.f32.xlu0 %v1209
        %v1241 = vpop.xlane.xlu0 %1240
        %1242 = vadd.xlane.f32.xlu0 %v1211
        %v1243 = vpop.xlane.xlu0 %1242
        %1244 = vadd.xlane.f32.xlu0 %v1213
        %v1245 = vpop.xlane.xlu0 %1244
        %1246 = vadd.xlane.f32.xlu0 %v1215
        %v1247 = vpop.xlane.xlu0 %1246
        %1248 = vadd.xlane.f32.xlu0 %v1217
        %v1249 = vpop.xlane.xlu0 %1248
        %1250 = vadd.xlane.f32.xlu0 %v1219
        %v1251 = vpop.xlane.xlu0 %1250
        %1252 = vadd.xlane.f32.xlu0 %v1221
        %v1253 = vpop.xlane.xlu0 %1252
        %1254 = vadd.xlane.f32.xlu0 %v1223
        %v1255 = vpop.xlane.xlu0 %1254
        %1256 = vadd.xlane.f32.xlu0 %v1225
        %v1257 = vpop.xlane.xlu0 %1256
        %1258 = vadd.xlane.f32.xlu0 %v1227
        %v1259 = vpop.xlane.xlu0 %1258
        %1260 = vadd.xlane.f32.xlu0 %v1229
        %v1261 = vpop.xlane.xlu0 %1260
        %1262 = vadd.xlane.f32.xlu0 %v1231
        %v1263 = vpop.xlane.xlu0 %1262
        %1264 = vadd.xlane.f32.xlu0 %v1233
        %v1265 = vpop.xlane.xlu0 %1264
        %1266 = vadd.xlane.f32.xlu0 %v1235
        %v1267 = vpop.xlane.xlu0 %1266
        %v1268 = vlog2.pop %v1237
        %v1269 = vmul.f32 %v1268, 0.6931472
        %v1270 = vlog2.pop %v1239
        %v1271 = vmul.f32 %v1270, 0.6931472
        %v1272 = vlog2.pop %v1241
        %v1273 = vmul.f32 %v1272, 0.6931472
        %v1274 = vlog2.pop %v1243
        %v1275 = vmul.f32 %v1274, 0.6931472
        %v1276 = vlog2.pop %v1245
        %v1277 = vmul.f32 %v1276, 0.6931472
        %v1278 = vlog2.pop %v1247
        %v1279 = vmul.f32 %v1278, 0.6931472
        %v1280 = vlog2.pop %v1249
        %v1281 = vmul.f32 %v1280, 0.6931472
        %v1282 = vlog2.pop %v1251
        %v1283 = vmul.f32 %v1282, 0.6931472
        %v1284 = vlog2.pop %v1253
        %v1285 = vmul.f32 %v1284, 0.6931472
        %v1286 = vlog2.pop %v1255
        %v1287 = vmul.f32 %v1286, 0.6931472
        %v1288 = vlog2.pop %v1257
        %v1289 = vmul.f32 %v1288, 0.6931472
        %v1290 = vlog2.pop %v1259
        %v1291 = vmul.f32 %v1290, 0.6931472
        %v1292 = vlog2.pop %v1261
        %v1293 = vmul.f32 %v1292, 0.6931472
        %v1294 = vlog2.pop %v1263
        %v1295 = vmul.f32 %v1294, 0.6931472
        %v1296 = vlog2.pop %v1265
        %v1297 = vmul.f32 %v1296, 0.6931472
        %v1298 = vlog2.pop %v1267
        %v1299 = vmul.f32 %v1298, 0.6931472
        %v1300 = vsub.f32 %v1188, %v1269
        %v1301 = vsub.f32 %v1189, %v1271
        %v1302 = vsub.f32 %v1190, %v1273
        %v1303 = vsub.f32 %v1191, %v1275
        %v1304 = vsub.f32 %v1192, %v1277
        %v1305 = vsub.f32 %v1193, %v1279
        %v1306 = vsub.f32 %v1194, %v1281
        %v1307 = vsub.f32 %v1195, %v1283
        %v1308 = vsub.f32 %v1196, %v1285
        %v1309 = vsub.f32 %v1197, %v1287
        %v1310 = vsub.f32 %v1198, %v1289
        %v1311 = vsub.f32 %v1199, %v1291
        %v1312 = vsub.f32 %v1200, %v1293
        %v1313 = vsub.f32 %v1201, %v1295
        %v1314 = vsub.f32 %v1202, %v1297
        %v1315 = vsub.f32 %v1203, %v1299
        %1316 = vst [vmem:[%s166] sm:$0xff] %v1300
        %1317 = vst [vmem:[%s166 + $0x8] sm:$0xff] %v1301
        %1318 = vst [vmem:[%s166 + $0x10] sm:$0xff] %v1302
        %1319 = vst [vmem:[%s166 + $0x18] sm:$0xff] %v1303
        %1320 = vst [vmem:[%s166 + $0x20] sm:$0xff] %v1304
        %1321 = vst [vmem:[%s166 + $0x28] sm:$0xff] %v1305
        %1322 = vst [vmem:[%s166 + $0x30] sm:$0xff] %v1306
        %1323 = vst [vmem:[%s166 + $0x38] sm:$0xff] %v1307
        %1324 = vst [vmem:[%s166 + $0x40] sm:$0xff] %v1308
        %1325 = vst [vmem:[%s166 + $0x48] sm:$0xff] %v1309
        %1326 = vst [vmem:[%s166 + $0x50] sm:$0xff] %v1310
        %1327 = vst [vmem:[%s166 + $0x58] sm:$0xff] %v1311
        %1328 = vst [vmem:[%s166 + $0x60] sm:$0xff] %v1312
        %1329 = vst [vmem:[%s166 + $0x68] sm:$0xff] %v1313
        %1330 = vst [vmem:[%s166 + $0x70] sm:$0xff] %v1314
        %1331 = vst [vmem:[%s166 + $0x78] sm:$0xff] %v1315
        %s1332 = sand.u32 %s93, 1
        %s1333 = scalar_lea.sflag [#allocation3], %s1332
        %s1334 = sand.u32 %s93, 1
        %s1335 = smul.addr %s1334, 128
        %s1336 = scalar_lea.vmem [#allocation2], %s1335
        // Predicated region
        $region33: #{tpu_custom_call.1} parent=31 // pred_check
          %p1337 = pneg %p103
        $region34: #{tpu_custom_call.1} parent=31 // pred_check_branch
          %1339 = sbr.rel (%p1337) target = $region36
        $region35: #{tpu_custom_call.1} parent=31 // pred_region
          %s1340 = smul.u32 16, %s17
          %s1342 = ssub.s32 2048, 2048
          %1343 = vsyncadd %s1333, %s1342
          %s1344 = smul.addr %s1340, 128
          %s1345 = scalar_lea.hbm %s3, %s1344
          %s1346 = sshll.u32 %s1336, 4
          %s1347 = int_to_ptr.vmem [resolvable:$true] %s1346
          %1352 = dma.vmem_to_hbm [thread:$0]  %s1347, 2048, %s1345, %s1333, 128, 128, 8
        $region36: #{tpu_custom_call.1} parent=31 // pred_fallthru
          _
      $region32: #{tpu_custom_call.1} parent=5 // pred_fallthru
        _
      %p1353 = scmp.le.s32.totalorder 2, %s12
      // Predicated region
      $region37: #{tpu_custom_call.1} parent=5 // pred_check
        %p1354 = pneg %p1353
      $region38: #{tpu_custom_call.1} parent=5 // pred_check_branch
        %1356 = sbr.rel (%p1354) target = $region40
      $region39: #{tpu_custom_call.1} parent=5 // pred_region
        %s1357 = ssub.s32 %s12, 2
        // Predicated region
        $region41: #{tpu_custom_call.1} parent=39 // pred_check
          %p1358 = pneg %p109
        $region42: #{tpu_custom_call.1} parent=39 // pred_check_branch
          %1360 = sbr.rel (%p1358) target = $region44
        $region43: #{tpu_custom_call.1} parent=39 // pred_region
          %s1361 = sand.u32 %s94, 1
          %s1362 = scalar_lea.sflag [#allocation3], %s1361
          %s1363 = sand.u32 %s94, 1
          %s1364 = smul.addr %s1363, 128
          %s1365 = scalar_lea.vmem [#allocation2], %s1364
          %1366 = dma.done %s1362, 2048
        $region44: #{tpu_custom_call.1} parent=39 // pred_fallthru
          _
      $region40: #{tpu_custom_call.1} parent=5 // pred_fallthru
        _
    $region6: #{tpu_custom_call.1} parent=1 // loop_footer
      %s16 = sadd.s32 1, %s12
    $region7: #{tpu_custom_call.1} parent=1 // loop_footer_branch
      %11 = sbr.rel target = $region3
    $region8: #{tpu_custom_call.1} parent=1 // loop_exit
      _
    %1367 = vsyncpa [#allocation3], 1
    %s1368 = scalar_lea.sflag [#allocation3], 1
    %1369 = vsyncpa %s1368, 1

</llo_original>
